<compile_context>
chip_gen: v7x
topology: tpu7x:2x2x1
jax: 0.10.0
libtpu: 0.0.40
codegen_flags: <defaults>
</compile_context>

<pallas_src>
import jax
import jax.numpy as jnp
from jax.experimental import pallas as pl
from jax.experimental.pallas import tpu as pltpu


_RGB_MEAN = {
    "DIV2K": (0.4488, 0.4371, 0.4040),
    "DF2K": (0.4690, 0.4490, 0.4036),
}
_RGB_STD = (1.0, 1.0, 1.0)  # hard-coded unit std -> the 1x1 conv is a pure bias add


def _mean_shift_kernel(x_ref, bias_ref, o_ref):
    # x_ref / o_ref: (Rb, Wb) pixel tile; bias_ref: (Rb, 1) per-row bias
    # broadcast along lanes.  std == 1.0 exactly, so no multiply is needed.
    # TODO(synk): reintroduce a per-row scale input if non-unit rgb_std is ever used.
    o_ref[...] = x_ref[...] + bias_ref[...]


def _round_up(a: int, m: int) -> int:
    return -(-a // m) * m


def _vmem_capacity_bytes() -> int:
    """Per-core VMEM capacity; conservative fallback if the query is unavailable."""
    try:
        return int(pltpu.get_tpu_info().vmem_capacity_bytes)
    except Exception:
        return 64 << 20  # v7x per-TC physical VMEM (smallest of the supported gens)


def ntire_mean_shift(x, rgb_range: int, sign: int = -1, data_type: str = "DIV2K",
                     *, min_pallas_bytes: int = 1 << 20):
    """Pallas implementation of NTIREMeanShift.forward (NCHW, C == 3)."""
    if data_type not in _RGB_MEAN:
        raise NotImplementedError(f"Unknown data type for MeanShift: {data_type}.")
    N, C, H, W = x.shape
    assert C == 3, "NTIREMeanShift expects 3 input channels (RGB)."

    mean = jnp.asarray(_RGB_MEAN[data_type], dtype=jnp.float32)
    std = jnp.asarray(_RGB_STD, dtype=jnp.float32)
    # Match PyTorch: bias is computed in f32, then cast to x's dtype.
    bias_c = (sign * rgb_range * mean / std).astype(x.dtype)    # (3,)

    itemsize = jnp.dtype(x.dtype).itemsize
    total_bytes = x.size * itemsize

    # Small-input fast path: kernel-launch / pipeline setup overhead dwarfs the
    # useful HBM traffic; let XLA fuse the affine with neighbouring ops.
    if total_bytes < min_pallas_bytes:
        return x + bias_c.reshape(1, 3, 1, 1)

    # Lane-dense 2D view: rows = (n, c) planes, cols = H*W pixels.
    nrows, npix = N * C, H * W
    x2 = x.reshape(nrows, npix)
    bias_col = jnp.tile(bias_c, N).reshape(nrows, 1)            # row i -> channel i % 3

    # ---------------- block sizing ----------------
    # Sublane packing factor: rows per block should be a multiple of 8 (f32),
    # 16 (bf16), 32 (int8/fp8) to avoid partially-packed layouts.
    row_mult = 8 * max(1, 4 // itemsize)
    vmem_cap = _vmem_capacity_bytes()
    # Pipelined footprint ~= 2 buffers x (in block + out block) + bias + slack.
    budget = min(vmem_cap // 2, 32 << 20) - (4 << 20)
    target_bytes = max(1 << 20, min(6 << 20, budget // 4))      # per-block byte target

    row_bytes = npix * itemsize
    max_rows_in_budget = target_bytes // max(row_bytes, 1)
    if max_rows_in_budget >= nrows:
        rb, wb = nrows, npix                                    # whole tensor in one block
    elif max_rows_in_budget >= row_mult:
        # Whole rows per block -> every block DMA is one contiguous HBM burst.
        rb = (max_rows_in_budget // row_mult) * row_mult
        wb = npix
    else:
        # A few rows are already bigger than the budget: tile along lanes too.
        rb = nrows if nrows < row_mult else row_mult
        wb = max(128, (target_bytes // (rb * itemsize)) // 128 * 128)
        if wb >= npix:
            wb = npix

    grid_r, grid_w = pl.cdiv(nrows, rb), pl.cdiv(npix, wb)

    # Never leave a non-trivial tensor as a single program: v7x has two
    # TensorCores sharing HBM and both grid axes are "parallel".
    if grid_r * grid_w == 1 and total_bytes >= (512 << 10):
        rb_half = _round_up((nrows + 1) // 2, row_mult)
        if rb_half < nrows:
            rb = rb_half
        else:
            wb_half = _round_up((npix + 1) // 2, 128)
            if wb_half < npix:
                wb = wb_half
        grid_r, grid_w = pl.cdiv(nrows, rb), pl.cdiv(npix, wb)

    # VMEM limit derived from the actual pipelined footprint (double-buffered
    # in + out + bias column) plus slack for Mosaic internal scratch.
    block_bytes = rb * wb * itemsize
    footprint = 2 * (2 * block_bytes + rb * itemsize)
    vmem_limit = int(min(max(footprint + (4 << 20), 8 << 20), vmem_cap // 2))

    cost = pl.CostEstimate(
        flops=nrows * npix,                                     # one add per element
        transcendentals=0,
        bytes_accessed=2 * nrows * npix * itemsize + nrows * itemsize,
    )

    out2 = pl.pallas_call(
        _mean_shift_kernel,
        out_shape=jax.ShapeDtypeStruct((nrows, npix), x.dtype),
        grid=(grid_r, grid_w),
        in_specs=[
            pl.BlockSpec((rb, wb), lambda i, j: (i, j)),
            pl.BlockSpec((rb, 1), lambda i, j: (i, 0)),
        ],
        out_specs=pl.BlockSpec((rb, wb), lambda i, j: (i, j)),
        compiler_params=pltpu.CompilerParams(
            dimension_semantics=("parallel", "parallel"),
            vmem_limit_bytes=vmem_limit,
        ),
        cost_estimate=cost,
    )(x2, bias_col)

    return out2.reshape(N, C, H, W)


def _reference_mean_shift(x, rgb_range, sign=-1, data_type="DIV2K"):
    """Pure-JAX reference: equivalent to the PyTorch 1x1 conv with eye/std weights."""
    mean = jnp.asarray(_RGB_MEAN[data_type], dtype=jnp.float32)
    std = jnp.asarray(_RGB_STD, dtype=jnp.float32)
    scale = (1.0 / std).astype(x.dtype).reshape(1, 3, 1, 1)
    bias = (sign * rgb_range * mean / std).astype(x.dtype).reshape(1, 3, 1, 1)
    return x * scale + bias


if __name__ == "__main__":
    # NTIREMeanShift operates on RGB images: C must be 3.
    N, C, H, W = 2, 3, 16, 16
    rgb_range = 255
    key = jax.random.PRNGKey(0)
    x = jax.random.uniform(key, (N, C, H, W), dtype=jnp.float32) * rgb_range

    ref = _reference_mean_shift(x, rgb_range=rgb_range, sign=-1, data_type="DIV2K")

    # Force the Pallas path even at this tiny test size.
    out = ntire_mean_shift(x, rgb_range=rgb_range, sign=-1, data_type="DIV2K",
                           min_pallas_bytes=0)
    out = jax.block_until_ready(out)
    assert out.shape == ref.shape and out.dtype == ref.dtype
    assert jnp.allclose(out, ref, atol=1e-5, rtol=1e-6), "pallas path mismatch vs reference"

    # Default call takes the small-input fast path; must match as well.
    out_fast = jax.block_until_ready(
        ntire_mean_shift(x, rgb_range=rgb_range, sign=-1, data_type="DIV2K"))
    assert jnp.allclose(out_fast, ref, atol=1e-5, rtol=1e-6), "fast path mismatch vs reference"

    print("KERNEL_OK")
</pallas_src>

<mosaic_0001>
module attributes {stable_mosaic.version = 11 : i64} {
  func.func @_mean_shift_kernel(%arg0: i32, %arg1: i32, %arg2: memref<6x256xf32, #tpu.memory_space<vmem>>, %arg3: memref<6x1xf32, #tpu.memory_space<vmem>>, %arg4: memref<6x256xf32, #tpu.memory_space<vmem>>) attributes {dimension_semantics = [#tpu.dimension_semantics<parallel>, #tpu.dimension_semantics<parallel>], iteration_bounds = array<i64: 1, 1>, scalar_prefetch = 0 : i64, scratch_operands = 0 : i64, tpu.core_type = #tpu.core_type<tc>, window_params = [{transform_indices = @transform_0, window_bounds = array<i64: 6, 256>}, {transform_indices = @transform_1, window_bounds = array<i64: 6, 1>}, {transform_indices = @transform_2, window_bounds = array<i64: 6, 256>}]} {
    %c0 = arith.constant 0 : index
    %c0_0 = arith.constant 0 : index
    %0 = vector.load %arg2[%c0, %c0_0] : memref<6x256xf32, #tpu.memory_space<vmem>>, vector<6x256xf32>
    %c0_1 = arith.constant 0 : index
    %c0_2 = arith.constant 0 : index
    %1 = vector.load %arg3[%c0_1, %c0_2] : memref<6x1xf32, #tpu.memory_space<vmem>>, vector<6x1xf32>
    %2 = vector.broadcast %1 : vector<6x1xf32> to vector<6x256xf32>
    %3 = arith.addf %0, %2 : vector<6x256xf32>
    %c0_3 = arith.constant 0 : index
    %c0_4 = arith.constant 0 : index
    %4 = vector.load %arg4[%c0_3, %c0_4] : memref<6x256xf32, #tpu.memory_space<vmem>>, vector<6x256xf32>
    tpu.vector_store %arg4[%c0_3, %c0_4], %3 {strides = array<i32>} : memref<6x256xf32, #tpu.memory_space<vmem>>, vector<6x256xf32>,
    return
  }
  func.func @transform_0(%arg0: i32, %arg1: i32) -> (i32, i32) {
    %c0_i32 = arith.constant 0 : i32
    return %arg0, %arg1 : i32, i32
  }
  func.func @transform_1(%arg0: i32, %arg1: i32) -> (i32, i32) {
    %c0_i32 = arith.constant 0 : i32
    %c0_i32_0 = arith.constant 0 : i32
    return %arg0, %c0_i32 : i32, i32
  }
  func.func @transform_2(%arg0: i32, %arg1: i32) -> (i32, i32) {
    %c0_i32 = arith.constant 0 : i32
    return %arg0, %arg1 : i32, i32
  }
}

</mosaic_0001>

<llo_original>
// kernel: tpu_custom_call.1
$region0: #{tpu_custom_call.1}
  #allocation0 [shape = 'u32[]', space=smem, size = 0x4, offset = 0x4, fixed_abs, tag = 'smem constant byte address 0x4 - core index']
  #allocation1 [shape = 'u32[144,128]{1,0:T(1,128)}', space=vmem, size = 0x12000, scoped, tag = 'internal scratch']
  %s0 = inlined_call_operand.hbm [shape: f32[6,256], index: 0, kind: input, shape index: {}]
  %s1 = inlined_call_operand.vmem [shape: f32[6,1], index: 1, kind: input, shape index: {}]
  %s2 = inlined_call_operand.hbm [shape: f32[6,256], index: 2, kind: output, shape index: {}]
  %s3 = sld [smem:[#allocation0]]
  $region22: #{tpu_custom_call.1} parent=0
    _
  %s5 = ssub.s32 1, %s3
  %s6 = scalar_select 0, %s5, %s3
  $region1: #{tpu_custom_call.1} parent=0
    #allocation2 [shape = 'u8[8192]{0}', space=vmem, size = 0x2000, scoped, tag = 'input window, operand 0, single buffered']
    #allocation3 [shape = 's32[1]{0}', space=sflag, size = 0x4, scoped, tag = 'scoped memory for tpu_custom_call.1']
    #allocation4 [shape = 's32[1]{0}', space=sflag, size = 0x4, scoped, tag = 'scoped memory for tpu_custom_call.1']
    #allocation5 [shape = 'u8[8192]{0}', space=vmem, size = 0x2000, scoped, tag = 'output window, operand 0, single buffered']
    %7 = vsyncpa [#allocation3], 0
    %8 = vsyncpa [#allocation4], 0
    // Predicated region
    $region2: #{tpu_custom_call.1} parent=1 // pred_check
      _
    $region3: #{tpu_custom_call.1} parent=1 // pred_check_branch
      %10 = sbr.rel (0) target = $region5
    $region4: #{tpu_custom_call.1} parent=1 // pred_region
      %s12 = ssub.s32 256, 256
      %13 = vsyncadd [#allocation3], %s12
      %s15 = sshll.u32 [#allocation2], 4
      %s16 = int_to_ptr.vmem [resolvable:$true] %s15
      %18 = dma.hbm_to_vmem [thread:$0]  %s0, 256, %s16, [#allocation3]
    $region5: #{tpu_custom_call.1} parent=1 // pred_fallthru
      _
    // Predicated region
    $region6: #{tpu_custom_call.1} parent=1 // pred_check
      _
    $region7: #{tpu_custom_call.1} parent=1 // pred_check_branch
      %20 = sbr.rel (0) target = $region9
    $region8: #{tpu_custom_call.1} parent=1 // pred_region
      _
    $region9: #{tpu_custom_call.1} parent=1 // pred_fallthru
      _
    // Predicated region
    $region10: #{tpu_custom_call.1} parent=1 // pred_check
      _
    $region11: #{tpu_custom_call.1} parent=1 // pred_check_branch
      %22 = sbr.rel (0) target = $region13
    $region12: #{tpu_custom_call.1} parent=1 // pred_region
      %23 = dma.done [#allocation3], 256
    $region13: #{tpu_custom_call.1} parent=1 // pred_fallthru
      _
    %v24 = vld [vmem:[#allocation2] sm:$0x3f]
    %v25 = vld [vmem:[#allocation2 + $0x8] sm:$0x3f]
    %v26 = vld [vmem:[%s1] sm:$0x3f]
    %28 = vset.pattern.permute.xlu0 0
    %29 = vperm.xlu0 %28, %v26
    %v30 = vpop.permute.xlu0 %29
    %v32 = vadd.f32 %v24, %v30
    %v33 = vadd.f32 %v25, %v30
    %34 = vst [vmem:[#allocation5] sm:$0x3f] %v32
    %35 = vst [vmem:[#allocation5 + $0x8] sm:$0x3f] %v33
    // Predicated region
    $region14: #{tpu_custom_call.1} parent=1 // pred_check
      _
    $region15: #{tpu_custom_call.1} parent=1 // pred_check_branch
      %37 = sbr.rel (0) target = $region17
    $region16: #{tpu_custom_call.1} parent=1 // pred_region
      %s39 = ssub.s32 256, 256
      %40 = vsyncadd [#allocation4], %s39
      %s42 = sshll.u32 [#allocation5], 4
      %s43 = int_to_ptr.vmem [resolvable:$true] %s42
      %45 = dma.vmem_to_hbm [thread:$0]  %s43, 256, %s2, [#allocation4]
    $region17: #{tpu_custom_call.1} parent=1 // pred_fallthru
      _
    // Predicated region
    $region18: #{tpu_custom_call.1} parent=1 // pred_check
      _
    $region19: #{tpu_custom_call.1} parent=1 // pred_check_branch
      %47 = sbr.rel (0) target = $region21
    $region20: #{tpu_custom_call.1} parent=1 // pred_region
      %48 = dma.done [#allocation4], 256
    $region21: #{tpu_custom_call.1} parent=1 // pred_fallthru
      _
    %49 = vsyncpa [#allocation3], 1
    %50 = vsyncpa [#allocation4], 1

</llo_original>
